<compile_context>
chip_gen: v7x
topology: tpu7x:2x2x1
jax: 0.10.0
libtpu: 0.0.40
codegen_flags: <defaults>
</compile_context>

<pallas_src>
import functools
import math

import jax
import jax.numpy as jnp
from jax.experimental import pallas as pl
from jax.experimental.pallas import tpu as pltpu


def fused_kernel(wc_ref, bc_ref, bf_ref, x_ref, wf_ref, o_ref, *, B, Cin, Cout):
    # wc_ref: (Cout*Cin,) f32 SMEM   1x1 conv weight, (o, c) row-major
    # bc_ref: (Cout,)     f32 SMEM   conv bias
    # bf_ref: (1,)        f32 SMEM   fc bias + folded zero-padding-halo term
    # x_ref : (Cin*B, HW) f32 VMEM   channel-major input: row = c*B + b (lane-dense)
    # wf_ref: (Cout, HW)  f32 VMEM   fc weight restricted to the real pixels
    # o_ref : (B, 1)      f32 VMEM   final output orientation, single store
    #
    # Cin/Cout/B are tiny static ints -> loops fully unrolled at trace time.
    xs = [x_ref[c * B:(c + 1) * B, :] for c in range(Cin)]   # (B, HW) each, loaded once
    acc = None
    for o in range(Cout):
        # 1x1 conv for output channel o: VPU scalar-broadcast FMAs on (B, HW) blocks
        pre = xs[0] * wc_ref[o * Cin]
        for c in range(1, Cin):
            pre = pre + xs[c] * wc_ref[o * Cin + c]
        act = jnp.maximum(pre + bc_ref[o], 0.0)              # relu, (B, HW)
        term = act * wf_ref[o:o + 1, :]                      # fused fc multiply (bcast over B)
        acc = term if acc is None else acc + term            # reduce over Cout (VPU)
    # lane (XLU) reduction over HW -> (B, 1); one full-block store, no relayout
    o_ref[...] = jnp.sum(acc, axis=1, keepdims=True) + bf_ref[0]


def prepare_params(conv_w, conv_b, fc_w, fc_b, H, W):
    """One-time, parameter-only preprocessing (hoisted out of the per-call path)."""
    Cout, Cin, kh, kw = conv_w.shape
    # The halo->bias fold below is only valid for kernel_size=1, stride=1, zero pad=1.
    assert (kh, kw) == (1, 1), "fold requires a 1x1 convolution"
    Hp, Wp = H + 2, W + 2
    HW = H * W
    assert fc_w.shape == (1, Cout * Hp * Wp), "fc sized to the flattened conv output"

    wc = conv_w.reshape(Cout * Cin).astype(jnp.float32)                 # (Cout*Cin,)
    bc = conv_b.astype(jnp.float32)                                     # (Cout,)

    # fc weight viewed against the NCHW flatten of the padded conv output
    wf_nchw = fc_w.reshape(Cout, Hp, Wp).astype(jnp.float32)
    wf_real = wf_nchw[:, 1:H + 1, 1:W + 1].reshape(Cout, HW)            # (Cout, HW)

    # Fold the zero-padding halo into the fc bias: for a 1x1 conv with zero
    # padding, every padded pixel's activation is exactly relu(conv_bias[o]).
    halo_w = jnp.sum(wf_nchw, axis=(1, 2)) - jnp.sum(wf_real, axis=1)   # (Cout,)
    bf_eff = fc_b.reshape(()) + jnp.sum(jnp.maximum(bc, 0.0) * halo_w)
    bf_eff = bf_eff.reshape(1).astype(jnp.float32)                      # (1,)

    return wc, bc, bf_eff, wf_real


@jax.jit
def model_forward(x_nchw, params):
    wc, bc, bf_eff, wf_real = params
    B, Cin, H, W = x_nchw.shape
    Cout = bc.shape[0]
    HW = H * W

    # channel-major rows (c*B + b) so the kernel gets contiguous (B, HW) blocks
    x_cm = jnp.transpose(x_nchw, (1, 0, 2, 3)).reshape(Cin * B, HW).astype(jnp.float32)

    kernel = functools.partial(fused_kernel, B=B, Cin=Cin, Cout=Cout)

    out = pl.pallas_call(
        kernel,
        out_shape=jax.ShapeDtypeStruct((B, 1), jnp.float32),
        in_specs=[
            pl.BlockSpec(memory_space=pltpu.MemorySpace.SMEM),     # wc
            pl.BlockSpec(memory_space=pltpu.MemorySpace.SMEM),     # bc
            pl.BlockSpec(memory_space=pltpu.MemorySpace.SMEM),     # bf_eff
            pl.BlockSpec(memory_space=pltpu.MemorySpace.VMEM),     # x_cm
            pl.BlockSpec(memory_space=pltpu.MemorySpace.VMEM),     # wf_real
        ],
        out_specs=pl.BlockSpec(memory_space=pltpu.MemorySpace.VMEM),
    )(wc, bc, bf_eff, x_cm, wf_real)
    return out                                                     # (B, 1) == v3


def reference_forward(x_nchw, conv_w, conv_b, fc_w, fc_b):
    B, Cin, H, W = x_nchw.shape
    Cout = conv_w.shape[0]
    xpad = jnp.pad(x_nchw, ((0, 0), (0, 0), (1, 1), (1, 1)))
    conv = jnp.einsum("oc,bchw->bohw", conv_w.reshape(Cout, Cin), xpad)
    conv = conv + conv_b[None, :, None, None]
    v1 = jnp.maximum(conv, 0.0)
    v2 = v1.reshape(B, -1)
    return v2 @ fc_w.T + fc_b


if __name__ == "__main__":
    # small shapes consistent with the forward pass (H*W = 256 -> lane dense)
    B, Cin, H, W = 2, 2, 16, 16
    Cout = 4
    Hp, Wp = H + 2, W + 2
    F = Cout * Hp * Wp              # flattened feature count (1296)

    key = jax.random.PRNGKey(0)
    k1, k2, k3, k4, k5 = jax.random.split(key, 5)

    # deterministic parameter init (xavier-normal-like for conv)
    conv_w = jax.random.normal(k1, (Cout, Cin, 1, 1), jnp.float32) * math.sqrt(
        2.0 / (Cin + Cout)
    )
    conv_b = jax.random.normal(k2, (Cout,), jnp.float32) * 0.1
    fc_w = jax.random.normal(k3, (1, F), jnp.float32) * (1.0 / math.sqrt(F))
    fc_b = jax.random.normal(k4, (1,), jnp.float32) * 0.1

    x = jax.random.normal(k5, (B, Cin, H, W), jnp.float32)

    # one-time parameter preprocessing (hoisted out of the per-call path)
    params = jax.tree_util.tree_map(
        jax.block_until_ready, prepare_params(conv_w, conv_b, fc_w, fc_b, H, W)
    )

    out = model_forward(x, params)          # compiles on first call
    out = jax.block_until_ready(out)
    out = jax.block_until_ready(model_forward(x, params))   # steady-state call

    ref = reference_forward(x, conv_w, conv_b, fc_w, fc_b)
    assert out.shape == (B, 1)
    assert jnp.allclose(out, ref, rtol=1e-4, atol=1e-4), (out, ref)

    print("KERNEL_OK")
</pallas_src>

<mosaic_0001>
module attributes {stable_mosaic.version = 11 : i64} {
  func.func @fused_kernel(%arg0: memref<8xf32, #tpu.memory_space<smem>>, %arg1: memref<4xf32, #tpu.memory_space<smem>>, %arg2: memref<1xf32, #tpu.memory_space<smem>>, %arg3: memref<4x256xf32, #tpu.memory_space<vmem>>, %arg4: memref<4x256xf32, #tpu.memory_space<vmem>>, %arg5: memref<2x1xf32, #tpu.memory_space<vmem>>) attributes {dimension_semantics = [], scalar_prefetch = 0 : i64, scratch_operands = 0 : i64, tpu.core_type = #tpu.core_type<tc>} {
    %c0 = arith.constant 0 : index
    %c0_0 = arith.constant 0 : index
    %0 = vector.load %arg3[%c0, %c0_0] : memref<4x256xf32, #tpu.memory_space<vmem>>, vector<2x256xf32>
    %c2 = arith.constant 2 : index
    %c0_1 = arith.constant 0 : index
    %1 = vector.load %arg3[%c2, %c0_1] : memref<4x256xf32, #tpu.memory_space<vmem>>, vector<2x256xf32>
    %c0_2 = arith.constant 0 : index
    %2 = memref.load %arg0[%c0_2] : memref<8xf32, #tpu.memory_space<smem>>
    %3 = vector.broadcast %2 : f32 to vector<2x256xf32>
    %4 = arith.mulf %0, %3 : vector<2x256xf32>
    %c1 = arith.constant 1 : index
    %5 = memref.load %arg0[%c1] : memref<8xf32, #tpu.memory_space<smem>>
    %6 = vector.broadcast %5 : f32 to vector<2x256xf32>
    %7 = arith.mulf %1, %6 : vector<2x256xf32>
    %8 = arith.addf %4, %7 : vector<2x256xf32>
    %c0_3 = arith.constant 0 : index
    %9 = memref.load %arg1[%c0_3] : memref<4xf32, #tpu.memory_space<smem>>
    %10 = vector.broadcast %9 : f32 to vector<2x256xf32>
    %11 = arith.addf %8, %10 : vector<2x256xf32>
    %cst = arith.constant 0.000000e+00 : f32
    %12 = vector.broadcast %cst : f32 to vector<2x256xf32>
    %13 = arith.maximumf %11, %12 : vector<2x256xf32>
    %c0_4 = arith.constant 0 : index
    %c0_5 = arith.constant 0 : index
    %14 = vector.load %arg4[%c0_4, %c0_5] : memref<4x256xf32, #tpu.memory_space<vmem>>, vector<1x256xf32>
    %15 = vector.broadcast %14 : vector<1x256xf32> to vector<2x256xf32>
    %16 = arith.mulf %13, %15 : vector<2x256xf32>
    %c2_6 = arith.constant 2 : index
    %17 = memref.load %arg0[%c2_6] : memref<8xf32, #tpu.memory_space<smem>>
    %18 = vector.broadcast %17 : f32 to vector<2x256xf32>
    %19 = arith.mulf %0, %18 : vector<2x256xf32>
    %c3 = arith.constant 3 : index
    %20 = memref.load %arg0[%c3] : memref<8xf32, #tpu.memory_space<smem>>
    %21 = vector.broadcast %20 : f32 to vector<2x256xf32>
    %22 = arith.mulf %1, %21 : vector<2x256xf32>
    %23 = arith.addf %19, %22 : vector<2x256xf32>
    %c1_7 = arith.constant 1 : index
    %24 = memref.load %arg1[%c1_7] : memref<4xf32, #tpu.memory_space<smem>>
    %25 = vector.broadcast %24 : f32 to vector<2x256xf32>
    %26 = arith.addf %23, %25 : vector<2x256xf32>
    %cst_8 = arith.constant 0.000000e+00 : f32
    %27 = vector.broadcast %cst_8 : f32 to vector<2x256xf32>
    %28 = arith.maximumf %26, %27 : vector<2x256xf32>
    %c1_9 = arith.constant 1 : index
    %c0_10 = arith.constant 0 : index
    %29 = vector.load %arg4[%c1_9, %c0_10] : memref<4x256xf32, #tpu.memory_space<vmem>>, vector<1x256xf32>
    %30 = vector.broadcast %29 : vector<1x256xf32> to vector<2x256xf32>
    %31 = arith.mulf %28, %30 : vector<2x256xf32>
    %32 = arith.addf %16, %31 : vector<2x256xf32>
    %c4 = arith.constant 4 : index
    %33 = memref.load %arg0[%c4] : memref<8xf32, #tpu.memory_space<smem>>
    %34 = vector.broadcast %33 : f32 to vector<2x256xf32>
    %35 = arith.mulf %0, %34 : vector<2x256xf32>
    %c5 = arith.constant 5 : index
    %36 = memref.load %arg0[%c5] : memref<8xf32, #tpu.memory_space<smem>>
    %37 = vector.broadcast %36 : f32 to vector<2x256xf32>
    %38 = arith.mulf %1, %37 : vector<2x256xf32>
    %39 = arith.addf %35, %38 : vector<2x256xf32>
    %c2_11 = arith.constant 2 : index
    %40 = memref.load %arg1[%c2_11] : memref<4xf32, #tpu.memory_space<smem>>
    %41 = vector.broadcast %40 : f32 to vector<2x256xf32>
    %42 = arith.addf %39, %41 : vector<2x256xf32>
    %cst_12 = arith.constant 0.000000e+00 : f32
    %43 = vector.broadcast %cst_12 : f32 to vector<2x256xf32>
    %44 = arith.maximumf %42, %43 : vector<2x256xf32>
    %c2_13 = arith.constant 2 : index
    %c0_14 = arith.constant 0 : index
    %45 = vector.load %arg4[%c2_13, %c0_14] : memref<4x256xf32, #tpu.memory_space<vmem>>, vector<1x256xf32>
    %46 = vector.broadcast %45 : vector<1x256xf32> to vector<2x256xf32>
    %47 = arith.mulf %44, %46 : vector<2x256xf32>
    %48 = arith.addf %32, %47 : vector<2x256xf32>
    %c6 = arith.constant 6 : index
    %49 = memref.load %arg0[%c6] : memref<8xf32, #tpu.memory_space<smem>>
    %50 = vector.broadcast %49 : f32 to vector<2x256xf32>
    %51 = arith.mulf %0, %50 : vector<2x256xf32>
    %c7 = arith.constant 7 : index
    %52 = memref.load %arg0[%c7] : memref<8xf32, #tpu.memory_space<smem>>
    %53 = vector.broadcast %52 : f32 to vector<2x256xf32>
    %54 = arith.mulf %1, %53 : vector<2x256xf32>
    %55 = arith.addf %51, %54 : vector<2x256xf32>
    %c3_15 = arith.constant 3 : index
    %56 = memref.load %arg1[%c3_15] : memref<4xf32, #tpu.memory_space<smem>>
    %57 = vector.broadcast %56 : f32 to vector<2x256xf32>
    %58 = arith.addf %55, %57 : vector<2x256xf32>
    %cst_16 = arith.constant 0.000000e+00 : f32
    %59 = vector.broadcast %cst_16 : f32 to vector<2x256xf32>
    %60 = arith.maximumf %58, %59 : vector<2x256xf32>
    %c3_17 = arith.constant 3 : index
    %c0_18 = arith.constant 0 : index
    %61 = vector.load %arg4[%c3_17, %c0_18] : memref<4x256xf32, #tpu.memory_space<vmem>>, vector<1x256xf32>
    %62 = vector.broadcast %61 : vector<1x256xf32> to vector<2x256xf32>
    %63 = arith.mulf %60, %62 : vector<2x256xf32>
    %64 = arith.addf %48, %63 : vector<2x256xf32>
    %cst_19 = arith.constant dense<0.000000e+00> : vector<2xf32>
    %65 = vector.multi_reduction <add>, %64, %cst_19 [1] : vector<2x256xf32> to vector<2xf32>
    %66 = vector.shape_cast %65 : vector<2xf32> to vector<2x1xf32>
    %c0_20 = arith.constant 0 : index
    %67 = memref.load %arg2[%c0_20] : memref<1xf32, #tpu.memory_space<smem>>
    %68 = vector.broadcast %67 : f32 to vector<2x1xf32>
    %69 = arith.addf %66, %68 : vector<2x1xf32>
    %c0_21 = arith.constant 0 : index
    %c0_22 = arith.constant 0 : index
    %70 = vector.load %arg5[%c0_21, %c0_22] : memref<2x1xf32, #tpu.memory_space<vmem>>, vector<2x1xf32>
    tpu.vector_store %arg5[%c0_21, %c0_22], %69 {strides = array<i32>} : memref<2x1xf32, #tpu.memory_space<vmem>>, vector<2x1xf32>,
    return
  }
}

</mosaic_0001>

<llo_original>
// kernel: model_forward.1
$region0: #{model_forward.1}
  #allocation0 [shape = 'u32[]', space=smem, size = 0x4, offset = 0x4, fixed_abs, tag = 'smem constant byte address 0x4 - core index']
  #allocation1 [shape = 'u32[144,128]{1,0:T(1,128)}', space=vmem, size = 0x12000, scoped, tag = 'internal scratch']
  #allocation2 [shape = 'f32[1]{0:T(128)S(6)}', space=smem, size = 0x200, scoped, tag = 'scoped memory for model_forward.1']
  %s0 = inlined_call_operand.vmem [shape: f32[8], index: 0, kind: input, shape index: {}]
  %s1 = inlined_call_operand.vmem [shape: f32[4], index: 1, kind: input, shape index: {}]
  %s2 = inlined_call_operand.<no memory space> [shape: f32[1], index: 2, kind: input, shape index: {}]
  %s3 = inlined_call_operand.vmem [shape: f32[4,256], index: 3, kind: input, shape index: {}]
  %s4 = inlined_call_operand.vmem [shape: f32[4,256], index: 4, kind: input, shape index: {}]
  %s5 = inlined_call_operand.vmem [shape: f32[2,1], index: 5, kind: output, shape index: {}]
  %s6 = sld [smem:[#allocation0]]
  $region38: #{model_forward.1} parent=0
    _
  %s8 = ssub.s32 1, %s6
  %s9 = scalar_select 0, %s8, %s6
  %10 = sst [smem:[#allocation2]] %s2
  $region1: #{model_forward.1} parent=0
    #allocation3 [shape = 'u8[512]{0}', space=smem, size = 0x200, scoped, tag = 'input window, operand 0, single buffered']
    #allocation4 [shape = 's32[1]{0}', space=sflag, size = 0x4, scoped, tag = 'scoped memory for model_forward.1']
    #allocation5 [shape = 'u8[512]{0}', space=smem, size = 0x200, scoped, tag = 'input window, operand 1, single buffered']
    #allocation6 [shape = 's32[1]{0}', space=sflag, size = 0x4, scoped, tag = 'scoped memory for model_forward.1']
    %11 = vsyncpa [#allocation4], 0
    %12 = vsyncpa [#allocation6], 0
    // Predicated region
    $region2: #{model_forward.1} parent=1 // pred_check
      _
    $region3: #{model_forward.1} parent=1 // pred_check_branch
      %14 = sbr.rel (0) target = $region5
    $region4: #{model_forward.1} parent=1 // pred_region
      %s16 = ssub.s32 16, 16
      %17 = vsyncadd [#allocation4], %s16
      %s19 = sshll.u32 %s0, 4
      %s20 = int_to_ptr.vmem [resolvable:$true] %s19
      %22 = dma.vmem_to_smem %s20, 16, [#allocation3], [#allocation4]
    $region5: #{model_forward.1} parent=1 // pred_fallthru
      _
    // Predicated region
    $region6: #{model_forward.1} parent=1 // pred_check
      _
    $region7: #{model_forward.1} parent=1 // pred_check_branch
      %24 = sbr.rel (0) target = $region9
    $region8: #{model_forward.1} parent=1 // pred_region
      %s26 = ssub.s32 16, 16
      %27 = vsyncadd [#allocation6], %s26
      %s29 = sshll.u32 %s1, 4
      %s30 = int_to_ptr.vmem [resolvable:$true] %s29
      %32 = dma.vmem_to_smem %s30, 16, [#allocation5], [#allocation6]
    $region9: #{model_forward.1} parent=1 // pred_fallthru
      _
    // Predicated region
    $region10: #{model_forward.1} parent=1 // pred_check
      _
    $region11: #{model_forward.1} parent=1 // pred_check_branch
      %34 = sbr.rel (0) target = $region13
    $region12: #{model_forward.1} parent=1 // pred_region
      _
    $region13: #{model_forward.1} parent=1 // pred_fallthru
      _
    // Predicated region
    $region14: #{model_forward.1} parent=1 // pred_check
      _
    $region15: #{model_forward.1} parent=1 // pred_check_branch
      %36 = sbr.rel (0) target = $region17
    $region16: #{model_forward.1} parent=1 // pred_region
      _
    $region17: #{model_forward.1} parent=1 // pred_fallthru
      _
    // Predicated region
    $region18: #{model_forward.1} parent=1 // pred_check
      _
    $region19: #{model_forward.1} parent=1 // pred_check_branch
      %38 = sbr.rel (0) target = $region21
    $region20: #{model_forward.1} parent=1 // pred_region
      _
    $region21: #{model_forward.1} parent=1 // pred_fallthru
      _
    // Predicated region
    $region22: #{model_forward.1} parent=1 // pred_check
      _
    $region23: #{model_forward.1} parent=1 // pred_check_branch
      %40 = sbr.rel (0) target = $region25
    $region24: #{model_forward.1} parent=1 // pred_region
      %41 = dma.done [#allocation4], 16
    $region25: #{model_forward.1} parent=1 // pred_fallthru
      _
    // Predicated region
    $region26: #{model_forward.1} parent=1 // pred_check
      _
    $region27: #{model_forward.1} parent=1 // pred_check_branch
      %43 = sbr.rel (0) target = $region29
    $region28: #{model_forward.1} parent=1 // pred_region
      %44 = dma.done [#allocation6], 16
    $region29: #{model_forward.1} parent=1 // pred_fallthru
      _
    %45 = sfence
    %v46 = vld [vmem:[%s3] sm:$0x33]
    %v47 = vld [vmem:[%s3] sm:$0xcc]
    %s48 = sld [smem:[#allocation3]]
    %v49 = vstv %s48
    %v50 = vmul.f32 %v46, %v49
    %s51 = sld [smem:[#allocation3 + $0x1]]
    %v52 = vstv %s51
    %v53 = vmul.f32 %v47, %v52
    %v55 = vrot.slane %v53, 6
    %v56 = vrot.slane %v55, 4
    %v58 = vadd.f32 %v50, %v56
    %s59 = sld [smem:[#allocation5]]
    %v60 = vstv %s59
    %v61 = vadd.f32 %v58, %v60
    %v62 = vmax.f32 %v61, 0.0
    %v63 = vld [vmem:[%s4] ss:$4 sm:$0x3]
    %v65 = vlaneseq
    %v66 = vshrl.u32 %v65, 7
    %v67 = vsub.s32 0, %v66
    %v68 = vrot.slane %v63, %v67
    %v69 = vlaneseq
    %v70 = vshrl.u32 %v69, 7
    %v71 = vsub.s32 1, %v70
    %v72 = vrot.slane %v63, %v71
    %v73 = vcombine.low %v68, %v72
    %v75 = vmul.f32 %v62, %v73
    %s76 = sld [smem:[#allocation3 + $0x2]]
    %v77 = vstv %s76
    %v78 = vmul.f32 %v46, %v77
    %s79 = sld [smem:[#allocation3 + $0x3]]
    %v80 = vstv %s79
    %v81 = vmul.f32 %v47, %v80
    %v83 = vrot.slane %v81, 6
    %v84 = vrot.slane %v83, 4
    %v86 = vadd.f32 %v78, %v84
    %s87 = sld [smem:[#allocation5 + $0x1]]
    %v88 = vstv %s87
    %v89 = vadd.f32 %v86, %v88
    %v90 = vmax.f32 %v89, 0.0
    %s91 = scalar_lea.vmem %s4, 1
    %v92 = vld [vmem:[%s91] ss:$4 sm:$0x3]
    %v94 = vlaneseq
    %v95 = vshrl.u32 %v94, 7
    %v96 = vsub.s32 0, %v95
    %v97 = vrot.slane %v92, %v96
    %v98 = vlaneseq
    %v99 = vshrl.u32 %v98, 7
    %v100 = vsub.s32 1, %v99
    %v101 = vrot.slane %v92, %v100
    %v102 = vcombine.low %v97, %v101
    %v104 = vmul.f32 %v90, %v102
    %v105 = vadd.f32 %v75, %v104
    %s106 = sld [smem:[#allocation3 + $0x4]]
    %v107 = vstv %s106
    %v108 = vmul.f32 %v46, %v107
    %s109 = sld [smem:[#allocation3 + $0x5]]
    %v110 = vstv %s109
    %v111 = vmul.f32 %v47, %v110
    %v113 = vrot.slane %v111, 6
    %v114 = vrot.slane %v113, 4
    %v116 = vadd.f32 %v108, %v114
    %s117 = sld [smem:[#allocation5 + $0x2]]
    %v118 = vstv %s117
    %v119 = vadd.f32 %v116, %v118
    %v120 = vmax.f32 %v119, 0.0
    %s121 = scalar_lea.vmem %s4, 2
    %v122 = vld [vmem:[%s121] ss:$4 sm:$0x3]
    %v124 = vlaneseq
    %v125 = vshrl.u32 %v124, 7
    %v126 = vsub.s32 0, %v125
    %v127 = vrot.slane %v122, %v126
    %v128 = vlaneseq
    %v129 = vshrl.u32 %v128, 7
    %v130 = vsub.s32 1, %v129
    %v131 = vrot.slane %v122, %v130
    %v132 = vcombine.low %v127, %v131
    %v134 = vmul.f32 %v120, %v132
    %v135 = vadd.f32 %v105, %v134
    %s136 = sld [smem:[#allocation3 + $0x6]]
    %v137 = vstv %s136
    %v138 = vmul.f32 %v46, %v137
    %s139 = sld [smem:[#allocation3 + $0x7]]
    %v140 = vstv %s139
    %v141 = vmul.f32 %v47, %v140
    %v143 = vrot.slane %v141, 6
    %v144 = vrot.slane %v143, 4
    %v146 = vadd.f32 %v138, %v144
    %s147 = sld [smem:[#allocation5 + $0x3]]
    %v148 = vstv %s147
    %v149 = vadd.f32 %v146, %v148
    %v150 = vmax.f32 %v149, 0.0
    %s151 = scalar_lea.vmem %s4, 3
    %v152 = vld [vmem:[%s151] ss:$4 sm:$0x3]
    %v154 = vlaneseq
    %v155 = vshrl.u32 %v154, 7
    %v156 = vsub.s32 0, %v155
    %v157 = vrot.slane %v152, %v156
    %v158 = vlaneseq
    %v159 = vshrl.u32 %v158, 7
    %v160 = vsub.s32 1, %v159
    %v161 = vrot.slane %v152, %v160
    %v162 = vcombine.low %v157, %v161
    %v164 = vmul.f32 %v150, %v162
    %v165 = vadd.f32 %v135, %v164
    %v167 = vcombine.high %v165, %v165
    %vm169 = vcmask 1041408
    %v170 = vsel %vm169, %v165, 0.0
    %v171 = vsel %vm169, %v167, 0.0
    %v172 = vadd.f32 %v170, %v171
    %173 = vadd.xlane.f32.xlu0 %v172
    %v174 = vpop.xlane.xlu0 %173
    %s175 = sld [smem:[#allocation2]]
    %v176 = vstv %s175
    %v177 = vadd.f32 %v174, %v176
    %vm178 = vcmask 1024
    %179 = vst.msk [vmem:[%s5] sm:$0x3] %vm178, %v177
    // Predicated region
    $region30: #{model_forward.1} parent=1 // pred_check
      _
    $region31: #{model_forward.1} parent=1 // pred_check_branch
      %181 = sbr.rel (0) target = $region33
    $region32: #{model_forward.1} parent=1 // pred_region
      _
    $region33: #{model_forward.1} parent=1 // pred_fallthru
      _
    // Predicated region
    $region34: #{model_forward.1} parent=1 // pred_check
      _
    $region35: #{model_forward.1} parent=1 // pred_check_branch
      %183 = sbr.rel (0) target = $region37
    $region36: #{model_forward.1} parent=1 // pred_region
      _
    $region37: #{model_forward.1} parent=1 // pred_fallthru
      _
    %184 = vsyncpa [#allocation4], 1
    %185 = vsyncpa [#allocation6], 1

</llo_original>
